<compile_context>
chip_gen: v7x
topology: tpu7x:2x2x1
jax: 0.10.0
libtpu: 0.0.40
codegen_flags: <defaults>
</compile_context>

<pallas_src>
import functools

import jax
import jax.numpy as jnp
from jax.experimental import pallas as pl
from jax.experimental.pallas import tpu as pltpu

_LANE = 128      # lane width (last-dim granularity)
_SUBLANE = 8     # sublane width (second-to-last-dim granularity)
_TARGET_BLOCK_BYTES = 2 << 20   # ~2 MiB f32 per (M, tile_n) block: near HBM roofline


def _round_up(v: int, m: int) -> int:
    return ((v + m - 1) // m) * m


def _cdiv(a: int, b: int) -> int:
    return (a + b - 1) // b


@functools.lru_cache(maxsize=1)
def _device_kind() -> str:
    try:
        return jax.devices()[0].device_kind.lower()
    except Exception:
        return ""


@functools.lru_cache(maxsize=1)
def _is_v7x() -> bool:
    return "v7" in _device_kind()


@functools.lru_cache(maxsize=1)
def _vmem_capacity_bytes() -> int:
    """Per-core VMEM capacity; per-generation fallback (128 MiB v5e/v6e, 64 MiB v7x)."""
    try:
        cap = getattr(pltpu.get_tpu_info(), "vmem_capacity_bytes", None)
        if cap:
            return int(cap)
    except Exception:
        pass
    return (64 << 20) if _is_v7x() else (128 << 20)


# ----------------------------------------------------------------------------
# Single-pass kernel: full reduction axis (rows) resident, columns tiled.
# ----------------------------------------------------------------------------
def _softmax_single_pass_kernel(x_ref, o_ref):
    x = x_ref[...].astype(jnp.float32)
    x_max = jnp.max(x, axis=0, keepdims=True)            # max over dim=0
    x_exp = jnp.exp(x - x_max)                            # exp(x - x_max)
    partition = jnp.sum(x_exp, axis=0, keepdims=True)     # sum over dim=0
    inv = pl.reciprocal(partition, approx=False)          # one recip per column
    o_ref[...] = (x_exp * inv).astype(o_ref.dtype)        # VPU multiply


def _softmax_single_pass(x: jax.Array, tile_n: int, grid_n: int,
                         vmem_limit: int) -> jax.Array:
    M, N = x.shape
    return pl.pallas_call(
        _softmax_single_pass_kernel,
        out_shape=jax.ShapeDtypeStruct((M, N), x.dtype),
        grid_spec=pltpu.PrefetchScalarGridSpec(
            num_scalar_prefetch=0,
            grid=(grid_n,),
            in_specs=[pl.BlockSpec((M, tile_n), lambda j: (0, j))],
            out_specs=pl.BlockSpec((M, tile_n), lambda j: (0, j)),
        ),
        compiler_params=pltpu.CompilerParams(
            dimension_semantics=("parallel",),
            vmem_limit_bytes=int(vmem_limit),
        ),
    )(x)


# ----------------------------------------------------------------------------
# Two-pass (large-M) path: online column stats, then normalize. VMEM footprint
# is bounded by (tile_m, tile_n), independent of M.  No padding: the partial
# last row block is masked in-kernel; partial lane blocks need no mask.
# ----------------------------------------------------------------------------
def _softmax_stats_kernel(x_ref, max_ref, inv_ref, *, m_total, tile_m):
    r = pl.program_id(1)  # row (reduction) axis, last grid dim, "arbitrary"

    @pl.when(r == 0)
    def _():
        max_ref[...] = jnp.full_like(max_ref, -jnp.inf)
        inv_ref[...] = jnp.zeros_like(inv_ref)            # running sum until the end

    x = x_ref[...].astype(jnp.float32)
    # Mask rows past the real extent (ragged last row block) with -inf so they
    # contribute exp(-inf - max) == 0 to the column statistics.
    row = jax.lax.broadcasted_iota(jnp.int32, x.shape, 0) + r * tile_m
    x = jnp.where(row < m_total, x, -jnp.inf)

    m_old = max_ref[...]
    m_new = jnp.maximum(m_old, jnp.max(x, axis=0, keepdims=True))
    corr = jnp.exp(m_old - m_new)
    inv_ref[...] = inv_ref[...] * corr + jnp.sum(jnp.exp(x - m_new), axis=0, keepdims=True)
    max_ref[...] = m_new

    @pl.when(r == pl.num_programs(1) - 1)
    def _():
        inv_ref[...] = pl.reciprocal(inv_ref[...], approx=False)


def _softmax_apply_kernel(x_ref, max_ref, inv_ref, o_ref):
    x = x_ref[...].astype(jnp.float32)
    o_ref[...] = (jnp.exp(x - max_ref[...]) * inv_ref[...]).astype(o_ref.dtype)


def _softmax_two_pass(x: jax.Array, tile_m: int, tile_n: int,
                      vmem_limit: int) -> jax.Array:
    M, N = x.shape
    grid = (_cdiv(N, tile_n), _cdiv(M, tile_m))
    stats_kernel = functools.partial(_softmax_stats_kernel, m_total=M, tile_m=tile_m)

    col_max, col_inv = pl.pallas_call(
        stats_kernel,
        out_shape=(jax.ShapeDtypeStruct((1, N), jnp.float32),
                   jax.ShapeDtypeStruct((1, N), jnp.float32)),
        grid_spec=pltpu.PrefetchScalarGridSpec(
            num_scalar_prefetch=0,
            grid=grid,
            in_specs=[pl.BlockSpec((tile_m, tile_n), lambda j, r: (r, j))],
            out_specs=[pl.BlockSpec((1, tile_n), lambda j, r: (0, j)),
                       pl.BlockSpec((1, tile_n), lambda j, r: (0, j))],
        ),
        compiler_params=pltpu.CompilerParams(
            dimension_semantics=("parallel", "arbitrary"),
            vmem_limit_bytes=int(vmem_limit),
        ),
    )(x)

    out = pl.pallas_call(
        _softmax_apply_kernel,
        out_shape=jax.ShapeDtypeStruct((M, N), x.dtype),
        grid_spec=pltpu.PrefetchScalarGridSpec(
            num_scalar_prefetch=0,
            grid=grid,
            in_specs=[pl.BlockSpec((tile_m, tile_n), lambda j, r: (r, j)),
                      pl.BlockSpec((1, tile_n), lambda j, r: (0, j)),
                      pl.BlockSpec((1, tile_n), lambda j, r: (0, j))],
            out_specs=pl.BlockSpec((tile_m, tile_n), lambda j, r: (r, j)),
        ),
        compiler_params=pltpu.CompilerParams(
            dimension_semantics=("parallel", "parallel"),
            vmem_limit_bytes=int(vmem_limit),
        ),
    )(x, col_max, col_inv)
    return out


# ----------------------------------------------------------------------------
# Public wrapper (matches SoftMaxStable.forward: softmax along dim=0).
# ----------------------------------------------------------------------------
def softmax_stable(x: jax.Array, *, force_two_pass: bool = False,
                   two_pass_tile_m: int = 512, two_pass_tile_n: int = 512,
                   max_tile_n: int | None = None) -> jax.Array:
    """Numerically-stable softmax along axis 0 (dim=0), matching SoftMaxStable."""
    orig_shape = x.shape
    if x.ndim == 1:
        x2 = x.reshape(orig_shape[0], 1)
    elif x.ndim == 2:
        x2 = x
    else:
        # dim=0 softmax is elementwise over all trailing dims -> flatten them.
        x2 = x.reshape(orig_shape[0], -1)

    M, N = x2.shape
    itemsize = x2.dtype.itemsize

    capacity = _vmem_capacity_bytes()        # 128 MiB (v5e/v6e) / 64 MiB (v7x)
    budget = int(capacity * 0.85)            # headroom for compiler scratch; ~54 MiB on v7x

    n128 = _round_up(max(N, 1), _LANE)
    # Per lane column: double-buffered input + double-buffered output (native dtype)
    # plus the two f32 intermediates (x, x_exp) materialized inside the kernel.
    per_col = 4 * M * itemsize + 2 * M * 4
    budget_cols = budget // per_col

    if force_two_pass or budget_cols < _LANE:
        # Even an (M, 128) block would blow the VMEM budget -> bounded two-pass path.
        tm = max(_SUBLANE, min(_round_up(two_pass_tile_m, _SUBLANE), _round_up(M, _SUBLANE)))
        tn = max(_LANE, min((two_pass_tile_n // _LANE) * _LANE, n128))

        def _two_pass_step(tm_, tn_):
            # dbl-buffered in + out + f32 temps + per-column stat rows
            return 4 * tm_ * tn_ * itemsize + 2 * tm_ * tn_ * 4 + 8 * tn_ * 4

        while _two_pass_step(tm, tn) > budget and tm > _SUBLANE:
            tm = max(_SUBLANE, tm // 2)
        vmem_limit = min(budget, max(int(_two_pass_step(tm, tn) * 1.5) + (2 << 20), 16 << 20))
        out = _softmax_two_pass(x2, tm, tn, vmem_limit)
    else:
        # Size the lane tile by bytes (~2 MiB f32 block), clamped by the lane axis
        # and the VMEM budget; small-M inputs get correspondingly wider tiles.
        tile_n = max(_LANE, (_TARGET_BLOCK_BYTES // max(1, M * 4)) // _LANE * _LANE)
        tile_n = min(tile_n, (budget_cols // _LANE) * _LANE, 32768)
        tile_n = max(_LANE, tile_n)
        if max_tile_n is not None:
            tile_n = max(_LANE, min(tile_n, (max_tile_n // _LANE) * _LANE))
        if _is_v7x() and n128 >= 4 * _LANE:
            # v7x has 2 TensorCores: prefer >= 4 column blocks so both cores stay
            # busy with double-buffering, but keep blocks >= ~512 KiB.
            want = _round_up(_cdiv(n128, 4), _LANE)
            if M * want * 4 >= (512 << 10):
                tile_n = min(tile_n, want)

        if tile_n >= n128:
            # Whole lane axis fits one block: use the exact width (== full array dim).
            tile_n, grid_n = N, 1
        else:
            # Ragged tail lane block: columns are independent under axis-0 softmax,
            # garbage in the over-read tail only lands in masked output stores.
            grid_n = _cdiv(N, tile_n)

        per_step = 4 * M * tile_n * itemsize + 2 * M * tile_n * 4
        vmem_limit = min(budget, max(int(per_step * 1.4) + (2 << 20), 16 << 20))
        out = _softmax_single_pass(x2, tile_n, grid_n, vmem_limit)

    return out.reshape(orig_shape)


if __name__ == "__main__":
    # Small shape consistent with the forward: softmax over dim=0 of (seq=8, hidden=32).
    x = jax.random.normal(jax.random.PRNGKey(0), (8, 32), dtype=jnp.float32)
    out = jax.block_until_ready(softmax_stable(x))
    ref = jax.nn.softmax(x, axis=0)
    assert out.shape == x.shape and out.dtype == x.dtype
    assert jnp.allclose(out, ref, atol=1e-6, rtol=1e-6), "mismatch vs reference softmax"
    assert jnp.allclose(jnp.sum(out, axis=0), jnp.ones((x.shape[1],)), atol=1e-5)

    # Exercise the ragged-lane-tail single-pass path (N not a multiple of tile_n).
    x2 = jax.random.normal(jax.random.PRNGKey(0), (24, 200), dtype=jnp.float32)
    out2 = jax.block_until_ready(softmax_stable(x2, max_tile_n=128))
    assert jnp.allclose(out2, jax.nn.softmax(x2, axis=0), atol=1e-6, rtol=1e-6)

    # Exercise the two-pass (online-stats) path with a ragged last row block (300 % 64 != 0).
    x3 = jax.random.normal(jax.random.PRNGKey(0), (300, 256), dtype=jnp.float32)
    out3 = jax.block_until_ready(
        softmax_stable(x3, force_two_pass=True, two_pass_tile_m=64, two_pass_tile_n=128))
    assert jnp.allclose(out3, jax.nn.softmax(x3, axis=0), atol=1e-6, rtol=1e-5)

    print("KERNEL_OK")
</pallas_src>

<mosaic_0001>
module attributes {stable_mosaic.version = 11 : i64} {
  func.func @_softmax_single_pass_kernel(%arg0: i32, %arg1: memref<8x32xf32, #tpu.memory_space<vmem>>, %arg2: memref<8x32xf32, #tpu.memory_space<vmem>>) attributes {dimension_semantics = [#tpu.dimension_semantics<parallel>], iteration_bounds = array<i64: 1>, scalar_prefetch = 0 : i64, scratch_operands = 0 : i64, tpu.core_type = #tpu.core_type<tc>, window_params = [{transform_indices = @transform_0, window_bounds = array<i64: 8, 32>}, {transform_indices = @transform_1, window_bounds = array<i64: 8, 32>}]} {
    %c0 = arith.constant 0 : index
    %c0_0 = arith.constant 0 : index
    %0 = vector.load %arg1[%c0, %c0_0] : memref<8x32xf32, #tpu.memory_space<vmem>>, vector<8x32xf32>
    %cst = arith.constant dense<0xFF800000> : vector<32xf32>
    %1 = vector.multi_reduction <maximumf>, %0, %cst [0] : vector<8x32xf32> to vector<32xf32>
    %2 = vector.shape_cast %1 : vector<32xf32> to vector<1x32xf32>
    %3 = vector.broadcast %2 : vector<1x32xf32> to vector<8x32xf32>
    %4 = arith.subf %0, %3 : vector<8x32xf32>
    %5 = math.exp %4 : vector<8x32xf32>
    %cst_1 = arith.constant dense<0.000000e+00> : vector<32xf32>
    %6 = vector.multi_reduction <add>, %5, %cst_1 [0] : vector<8x32xf32> to vector<32xf32>
    %7 = vector.shape_cast %6 : vector<32xf32> to vector<1x32xf32>
    %8 = tpu.reciprocal %7 : vector<1x32xf32> -> vector<1x32xf32>
    %9 = vector.broadcast %8 : vector<1x32xf32> to vector<8x32xf32>
    %10 = arith.mulf %5, %9 : vector<8x32xf32>
    %c0_2 = arith.constant 0 : index
    %c0_3 = arith.constant 0 : index
    %11 = vector.load %arg2[%c0_2, %c0_3] : memref<8x32xf32, #tpu.memory_space<vmem>>, vector<8x32xf32>
    tpu.vector_store %arg2[%c0_2, %c0_3], %10 {strides = array<i32>} : memref<8x32xf32, #tpu.memory_space<vmem>>, vector<8x32xf32>,
    return
  }
  func.func @transform_0(%arg0: i32) -> (i32, i32) {
    %c0_i32 = arith.constant 0 : i32
    %c0_i32_0 = arith.constant 0 : i32
    return %c0_i32, %arg0 : i32, i32
  }
  func.func @transform_1(%arg0: i32) -> (i32, i32) {
    %c0_i32 = arith.constant 0 : i32
    %c0_i32_0 = arith.constant 0 : i32
    return %c0_i32, %arg0 : i32, i32
  }
}

</mosaic_0001>

<llo_original>
// kernel: tpu_custom_call.1
$region0: #{tpu_custom_call.1}
  #allocation0 [shape = 'u32[]', space=smem, size = 0x4, offset = 0x4, fixed_abs, tag = 'smem constant byte address 0x4 - core index']
  #allocation1 [shape = 'u32[144,128]{1,0:T(1,128)}', space=vmem, size = 0x12000, scoped, tag = 'internal scratch']
  %s0 = inlined_call_operand.hbm [shape: f32[8,32], index: 0, kind: input, shape index: {}]
  %s1 = inlined_call_operand.hbm [shape: f32[8,32], index: 1, kind: output, shape index: {}]
  %s2 = sld [smem:[#allocation0]]
  $region18: #{tpu_custom_call.1} parent=0
    _
  %s4 = ssub.s32 1, %s2
  %s5 = scalar_select 0, %s4, %s2
  $region1: #{tpu_custom_call.1} parent=0
    #allocation2 [shape = 'u8[4096]{0}', space=vmem, size = 0x1000, scoped, tag = 'input window, operand 0, single buffered']
    #allocation3 [shape = 's32[1]{0}', space=sflag, size = 0x4, scoped, tag = 'scoped memory for tpu_custom_call.1']
    #allocation4 [shape = 's32[1]{0}', space=sflag, size = 0x4, scoped, tag = 'scoped memory for tpu_custom_call.1']
    #allocation5 [shape = 'u8[4096]{0}', space=vmem, size = 0x1000, scoped, tag = 'output window, operand 0, single buffered']
    %6 = vsyncpa [#allocation3], 0
    %7 = vsyncpa [#allocation4], 0
    // Predicated region
    $region2: #{tpu_custom_call.1} parent=1 // pred_check
      _
    $region3: #{tpu_custom_call.1} parent=1 // pred_check_branch
      %9 = sbr.rel (0) target = $region5
    $region4: #{tpu_custom_call.1} parent=1 // pred_region
      %s11 = ssub.s32 128, 128
      %12 = vsyncadd [#allocation3], %s11
      %s14 = sshll.u32 [#allocation2], 4
      %s15 = int_to_ptr.vmem [resolvable:$true] %s14
      %17 = dma.hbm_to_vmem [thread:$0]  %s0, 128, %s15, [#allocation3]
    $region5: #{tpu_custom_call.1} parent=1 // pred_fallthru
      _
    // Predicated region
    $region6: #{tpu_custom_call.1} parent=1 // pred_check
      _
    $region7: #{tpu_custom_call.1} parent=1 // pred_check_branch
      %19 = sbr.rel (0) target = $region9
    $region8: #{tpu_custom_call.1} parent=1 // pred_region
      %20 = dma.done [#allocation3], 128
    $region9: #{tpu_custom_call.1} parent=1 // pred_fallthru
      _
    %v21 = vld [vmem:[#allocation2] sm:$0xff]
    %vm22 = vcmask 261120
    %v23 = vsel %vm22, %v21, -inf
    %v24 = vrot.slane %v23, 4
    %v25 = vmax.f32 %v23, %v24
    %v26 = vrot.slane %v25, 2
    %v27 = vmax.f32 %v25, %v26
    %v28 = vrot.slane %v27, 1
    %v29 = vmax.f32 %v27, %v28
    %v30 = vsub.f32 %v21, %v29
    %v31 = vmul.f32 %v30, 1.442695
    %v32 = vpow.pop %v31
    %v33 = vsel %vm22, %v32, 0.0
    %v34 = vrot.slane %v33, 4
    %v35 = vadd.f32 %v33, %v34
    %v36 = vrot.slane %v35, 2
    %v37 = vadd.f32 %v35, %v36
    %v38 = vrot.slane %v37, 1
    %v39 = vadd.f32 %v37, %v38
    %v40 = vrcp.pop %v39
    %v41 = vmul.f32 %v32, %v40
    %42 = vst.msk [vmem:[#allocation5] sm:$0xff] %vm22, %v41
    // Predicated region
    $region10: #{tpu_custom_call.1} parent=1 // pred_check
      _
    $region11: #{tpu_custom_call.1} parent=1 // pred_check_branch
      %44 = sbr.rel (0) target = $region13
    $region12: #{tpu_custom_call.1} parent=1 // pred_region
      %s46 = ssub.s32 128, 128
      %47 = vsyncadd [#allocation4], %s46
      %s49 = sshll.u32 [#allocation5], 4
      %s50 = int_to_ptr.vmem [resolvable:$true] %s49
      %52 = dma.vmem_to_hbm [thread:$0]  %s50, 128, %s1, [#allocation4]
    $region13: #{tpu_custom_call.1} parent=1 // pred_fallthru
      _
    // Predicated region
    $region14: #{tpu_custom_call.1} parent=1 // pred_check
      _
    $region15: #{tpu_custom_call.1} parent=1 // pred_check_branch
      %54 = sbr.rel (0) target = $region17
    $region16: #{tpu_custom_call.1} parent=1 // pred_region
      %55 = dma.done [#allocation4], 128
    $region17: #{tpu_custom_call.1} parent=1 // pred_fallthru
      _
    %56 = vsyncpa [#allocation3], 1
    %57 = vsyncpa [#allocation4], 1

</llo_original>
